<compile_context>
chip_gen: v7x
topology: tpu7x:2x2x1
jax: 0.10.0
libtpu: 0.0.40
codegen_flags: <defaults>
</compile_context>

<pallas_src>
import numpy as np
import jax
import jax.numpy as jnp
from jax.experimental import pallas as pl
from jax.experimental.pallas import tpu as pltpu

LANE = 128
SUBLANE = 8  # f32 sublane granularity for the batch-blocked arrays


# ----------------------------------------------------------- basis helpers --
def linear_space(past_seq_len, future_seq_len):
    ls = np.arange(-past_seq_len, future_seq_len, 1) / future_seq_len
    b_ls = np.abs(np.flip(ls[:past_seq_len]))
    f_ls = ls[past_seq_len:]
    return b_ls, f_ls


def _trend_basis(t, p):
    # T[i, j] = t[j] ** i  (matches torch.tensor([t ** i for i in range(p)]).float())
    if p > 4:
        raise ValueError("thetas_dim is too big.")
    return np.stack([t ** i for i in range(p)], axis=0).astype(np.float32)


def _round_up(n, m):
    return (n + m - 1) // m * m


# ------------------------------------------------------------------ kernel --
def trend_block_kernel(x_ref, w1_ref, wmid_ref, b_ref, wout_ref,
                       back_ref, fore_ref):
    """One batch tile of the TrendBlock forward.

    x_ref    : (TB, P)          f32 (cast to compute dtype in-kernel)
    w1_ref   : (P, U)           compute dtype
    wmid_ref : (3, U, U)        compute dtype   (fc2 / fc3 / fc4 packed)
    b_ref    : (4, U)           f32             (fc1..fc4 biases packed)
    wout_ref : (U, past+fut)    compute dtype   (= wt @ [T_back | T_fore])
    back_ref : (TB, past)       out dtype
    fore_ref : (TB, fut)        out dtype
    """
    cd = w1_ref.dtype
    b = b_ref[...]                                             # (4, U) f32

    # fc1 + bias + ReLU, activation carried in the compute dtype.
    h = jnp.maximum(
        jnp.dot(x_ref[...].astype(cd), w1_ref[...],
                preferred_element_type=jnp.float32) + b[0:1, :],
        0.0).astype(cd)

    # fc2..fc4; static slices of the packed weight are zero-cost views.
    for k in range(3):
        h = jnp.maximum(
            jnp.dot(h, wmid_ref[k], preferred_element_type=jnp.float32)
            + b[k + 1:k + 2, :],
            0.0).astype(cd)

    # Fused (shared) theta projection + both trend bases: one MXU matmul,
    # then split the 24-wide result into the two tight outputs.
    out = jnp.dot(h, wout_ref[...], preferred_element_type=jnp.float32)
    past = back_ref.shape[-1]
    back_ref[...] = out[:, :past].astype(back_ref.dtype)
    fore_ref[...] = out[:, past:].astype(fore_ref.dtype)


# --------------------------------------------------------------- wrappers ---
def prepare_params(params, T_back, T_fore, *, compute_dtype=jnp.bfloat16):
    """Fold / pack / pad the PyTorch-style parameters for the kernel."""
    past = T_back.shape[1]
    fut = T_fore.shape[1]
    p_in, units = params["w1"].shape
    U = _round_up(units, LANE)   # hidden width -> full 128 lanes (exact zero padding)

    # Exact fold: shared theta_fc (bias=False) composed with both trend bases.
    w_out = params["wt"] @ jnp.concatenate([T_back, T_fore], axis=1)  # (units, past+fut)

    def pad2(a, rows, cols):
        return jnp.pad(a, ((0, rows - a.shape[0]), (0, cols - a.shape[1])))

    w1 = pad2(params["w1"], p_in, U)
    wmid = jnp.stack([pad2(params["w2"], U, U),
                      pad2(params["w3"], U, U),
                      pad2(params["w4"], U, U)], axis=0)
    bias = jnp.stack([jnp.pad(params[f"b{k}"][0], (0, U - units))
                      for k in (1, 2, 3, 4)], axis=0)
    w_out = pad2(w_out, U, past + fut)          # pad rows only; columns stay tight

    return {
        "w1": w1.astype(compute_dtype),
        "wmid": wmid.astype(compute_dtype),
        "b": bias.astype(jnp.float32),
        "wout": w_out.astype(compute_dtype),
        "past": past,
        "fut": fut,
        "compute_dtype": compute_dtype,
    }


def trend_block_forward(x, prep, *, batch_tile=4096, out_dtype=jnp.float32):
    """Run the fused TrendBlock forward.  Returns (backcast, forecast)."""
    B, P = x.shape
    past, fut = prep["past"], prep["fut"]
    w1, wmid, b, wout = prep["w1"], prep["wmid"], prep["b"], prep["wout"]
    U = w1.shape[1]

    # Batch tile: big enough to amortize the ~0.35 us/step grid overhead,
    # small enough that the grid keeps >= ~4 steps (so v7x megacore can shard
    # the "parallel" batch axis across both TensorCores).  x stays f32 and
    # un-padded in HBM; a non-divisible last tile is handled by Pallas'
    # masked partial-block reads/writes (never written out of bounds).
    tb = min(batch_tile, max(16, _round_up(pl.cdiv(B, 4), 16)))
    tb = max(SUBLANE, min(tb, _round_up(B, SUBLANE)))
    tb = _round_up(tb, SUBLANE)
    grid = pl.cdiv(B, tb)

    flops = 2 * B * (P * U + 3 * U * U + U * (past + fut))
    bytes_accessed = int(
        x.size * x.dtype.itemsize
        + B * (past + fut) * jnp.dtype(out_dtype).itemsize
        + sum(int(a.size) * a.dtype.itemsize for a in (w1, wmid, b, wout)))

    backcast, forecast = pl.pallas_call(
        trend_block_kernel,
        out_shape=(jax.ShapeDtypeStruct((B, past), out_dtype),
                   jax.ShapeDtypeStruct((B, fut), out_dtype)),
        grid_spec=pltpu.PrefetchScalarGridSpec(
            num_scalar_prefetch=0,
            grid=(grid,),
            in_specs=[
                pl.BlockSpec((tb, P), lambda i: (i, 0)),      # x: blocked on batch
                pl.BlockSpec(w1.shape, lambda i: (0, 0)),     # weights stay resident
                pl.BlockSpec(wmid.shape, lambda i: (0, 0, 0)),
                pl.BlockSpec(b.shape, lambda i: (0, 0)),
                pl.BlockSpec(wout.shape, lambda i: (0, 0)),
            ],
            out_specs=[
                pl.BlockSpec((tb, past), lambda i: (i, 0)),
                pl.BlockSpec((tb, fut), lambda i: (i, 0)),
            ],
        ),
        compiler_params=pltpu.CompilerParams(
            dimension_semantics=("parallel",),      # shards batch across TCs on v7x
            vmem_limit_bytes=32 * 1024 * 1024,      # safe headroom on v5e/v6e/v7x
        ),
        cost_estimate=pl.CostEstimate(
            flops=flops, transcendentals=0, bytes_accessed=bytes_accessed),
    )(x, w1, wmid, b, wout)

    return backcast, forecast


# --------------------------------------------------------------- references -
def init_params(key, past_seq_len, units, thetas_dim):
    # Deterministic synthetic weights, stored pre-transposed as (in, out):
    # PyTorch Linear does x @ W.T + b with W of shape (out, in); we keep W.T.
    ks = jax.random.split(key, 5)

    def lin(k, fan_in, fan_out):
        bound = 1.0 / np.sqrt(fan_in)
        kw, kb = jax.random.split(k)
        w = jax.random.uniform(kw, (fan_in, fan_out), jnp.float32, -bound, bound)
        b = jax.random.uniform(kb, (1, fan_out), jnp.float32, -bound, bound)
        return w, b

    w1, b1 = lin(ks[0], past_seq_len, units)
    w2, b2 = lin(ks[1], units, units)
    w3, b3 = lin(ks[2], units, units)
    w4, b4 = lin(ks[3], units, units)
    bound = 1.0 / np.sqrt(units)
    wt = jax.random.uniform(ks[4], (units, thetas_dim), jnp.float32, -bound, bound)
    return {"w1": w1, "b1": b1, "w2": w2, "b2": b2,
            "w3": w3, "b3": b3, "w4": w4, "b4": b4, "wt": wt}


def reference_from_prepared(x, prep):
    """Pure-JAX replay of the exact math the kernel performs (same operand
    casts, f32 accumulation) -- tight correctness reference."""
    f32 = jnp.float32
    cd = prep["compute_dtype"]
    w1 = prep["w1"].astype(f32)
    wmid = prep["wmid"].astype(f32)
    b = prep["b"]
    wout = prep["wout"].astype(f32)
    h = jnp.maximum(x.astype(cd).astype(f32) @ w1 + b[0:1], 0.0)
    h = h.astype(cd).astype(f32)
    for k in range(3):
        h = jnp.maximum(h @ wmid[k] + b[k + 1:k + 2], 0.0).astype(cd).astype(f32)
    out = h @ wout
    past, fut = prep["past"], prep["fut"]
    return out[:, :past], out[:, past:past + fut]


def reference_forward_f32(x, params, T_back, T_fore):
    """Original un-fused f32 module math (loose check: bf16 rounding only)."""
    h = jnp.maximum(x @ params["w1"] + params["b1"], 0.0)
    h = jnp.maximum(h @ params["w2"] + params["b2"], 0.0)
    h = jnp.maximum(h @ params["w3"] + params["b3"], 0.0)
    h = jnp.maximum(h @ params["w4"] + params["b4"], 0.0)
    theta = h @ params["wt"]
    return theta @ T_back, theta @ T_fore


# --------------------------------------------------------------------- main -
if __name__ == "__main__":
    batch = 8
    past_seq_len = 16
    future_seq_len = 8
    units = 32
    thetas_dim = 4

    b_ls, f_ls = linear_space(past_seq_len, future_seq_len)
    T_back = jnp.asarray(_trend_basis(b_ls, thetas_dim))   # (thetas_dim, past_seq_len)
    T_fore = jnp.asarray(_trend_basis(f_ls, thetas_dim))   # (thetas_dim, future_seq_len)

    key = jax.random.PRNGKey(0)
    kx, kp = jax.random.split(key)
    x = jax.random.normal(kx, (batch, past_seq_len), jnp.float32)
    params = init_params(kp, past_seq_len, units, thetas_dim)

    prep = prepare_params(params, T_back, T_fore, compute_dtype=jnp.bfloat16)

    backcast, forecast = trend_block_forward(x, prep)
    backcast = jax.block_until_ready(backcast)
    forecast = jax.block_until_ready(forecast)

    # Tight check: same (bf16-operand, f32-accumulate) math replayed in pure JAX.
    rb, rf = reference_from_prepared(x, prep)
    np.testing.assert_allclose(np.asarray(backcast), np.asarray(rb), rtol=1e-3, atol=1e-3)
    np.testing.assert_allclose(np.asarray(forecast), np.asarray(rf), rtol=1e-3, atol=1e-3)

    # Loose check vs the original un-fused f32 module math (bf16 rounding only).
    ob, of = reference_forward_f32(x, params, T_back, T_fore)
    np.testing.assert_allclose(np.asarray(backcast), np.asarray(ob), rtol=5e-2, atol=2.5e-1)
    np.testing.assert_allclose(np.asarray(forecast), np.asarray(of), rtol=5e-2, atol=2.5e-1)

    assert backcast.shape == (batch, past_seq_len)
    assert forecast.shape == (batch, future_seq_len)

    print("KERNEL_OK")
</pallas_src>

<mosaic_0001>
module attributes {stable_mosaic.version = 11 : i64} {
  func.func @trend_block_kernel(%arg0: i32, %arg1: memref<8x16xf32, #tpu.memory_space<vmem>>, %arg2: memref<16x128xbf16, #tpu.memory_space<vmem>>, %arg3: memref<3x128x128xbf16, #tpu.memory_space<vmem>>, %arg4: memref<4x128xf32, #tpu.memory_space<vmem>>, %arg5: memref<128x24xbf16, #tpu.memory_space<vmem>>, %arg6: memref<8x16xf32, #tpu.memory_space<vmem>>, %arg7: memref<8x8xf32, #tpu.memory_space<vmem>>) attributes {dimension_semantics = [#tpu.dimension_semantics<parallel>], iteration_bounds = array<i64: 1>, scalar_prefetch = 0 : i64, scratch_operands = 0 : i64, tpu.core_type = #tpu.core_type<tc>, window_params = [{transform_indices = @transform_0, window_bounds = array<i64: 8, 16>}, {pipeline_mode = #tpu.pipeline_mode<synchronous>, transform_indices = @transform_1, window_bounds = array<i64: 16, 128>}, {pipeline_mode = #tpu.pipeline_mode<synchronous>, transform_indices = @transform_2, window_bounds = array<i64: 3, 128, 128>}, {pipeline_mode = #tpu.pipeline_mode<synchronous>, transform_indices = @transform_3, window_bounds = array<i64: 4, 128>}, {pipeline_mode = #tpu.pipeline_mode<synchronous>, transform_indices = @transform_4, window_bounds = array<i64: 128, 24>}, {transform_indices = @transform_5, window_bounds = array<i64: 8, 16>}, {transform_indices = @transform_6, window_bounds = array<i64: 8, 8>}]} {
    %c0 = arith.constant 0 : index
    %c0_0 = arith.constant 0 : index
    %0 = vector.load %arg4[%c0, %c0_0] : memref<4x128xf32, #tpu.memory_space<vmem>>, vector<4x128xf32>
    %c0_1 = arith.constant 0 : index
    %c0_2 = arith.constant 0 : index
    %1 = vector.load %arg1[%c0_1, %c0_2] : memref<8x16xf32, #tpu.memory_space<vmem>>, vector<8x16xf32>
    %2 = arith.truncf %1 : vector<8x16xf32> to vector<8x16xbf16>
    %c0_3 = arith.constant 0 : index
    %c0_4 = arith.constant 0 : index
    %3 = vector.load %arg2[%c0_3, %c0_4] : memref<16x128xbf16, #tpu.memory_space<vmem>>, vector<16x128xbf16>
    %cst = arith.constant dense<0.000000e+00> : vector<8x128xf32>
    %4 = tpu.matmul %2, %3, %cst {dimension_numbers = #tpu.dot_dimension_numbers<[1], [0], [0], [1], [0, 0, 1, 1], [], []>} : vector<8x16xbf16>, vector<16x128xbf16>, vector<8x128xf32> -> vector<8x128xf32>
    %5 = vector.extract_strided_slice %0 {offsets = [0, 0], sizes = [1, 128], strides = [1, 1]} : vector<4x128xf32> to vector<1x128xf32>
    %6 = vector.broadcast %5 : vector<1x128xf32> to vector<8x128xf32>
    %7 = arith.addf %4, %6 : vector<8x128xf32>
    %cst_5 = arith.constant 0.000000e+00 : f32
    %8 = vector.broadcast %cst_5 : f32 to vector<8x128xf32>
    %9 = arith.maximumf %7, %8 : vector<8x128xf32>
    %10 = arith.truncf %9 : vector<8x128xf32> to vector<8x128xbf16>
    %c0_6 = arith.constant 0 : index
    %c0_7 = arith.constant 0 : index
    %c0_8 = arith.constant 0 : index
    %11 = vector.load %arg3[%c0_6, %c0_7, %c0_8] : memref<3x128x128xbf16, #tpu.memory_space<vmem>>, vector<1x128x128xbf16>
    %12 = vector.shape_cast %11 : vector<1x128x128xbf16> to vector<128x128xbf16>
    %cst_9 = arith.constant dense<0.000000e+00> : vector<8x128xf32>
    %13 = tpu.matmul %10, %12, %cst_9 {dimension_numbers = #tpu.dot_dimension_numbers<[1], [0], [0], [1], [0, 0, 1, 1], [], []>} : vector<8x128xbf16>, vector<128x128xbf16>, vector<8x128xf32> -> vector<8x128xf32>
    %14 = vector.extract_strided_slice %0 {offsets = [1, 0], sizes = [1, 128], strides = [1, 1]} : vector<4x128xf32> to vector<1x128xf32>
    %15 = vector.broadcast %14 : vector<1x128xf32> to vector<8x128xf32>
    %16 = arith.addf %13, %15 : vector<8x128xf32>
    %cst_10 = arith.constant 0.000000e+00 : f32
    %17 = vector.broadcast %cst_10 : f32 to vector<8x128xf32>
    %18 = arith.maximumf %16, %17 : vector<8x128xf32>
    %19 = arith.truncf %18 : vector<8x128xf32> to vector<8x128xbf16>
    %c1 = arith.constant 1 : index
    %c0_11 = arith.constant 0 : index
    %c0_12 = arith.constant 0 : index
    %20 = vector.load %arg3[%c1, %c0_11, %c0_12] : memref<3x128x128xbf16, #tpu.memory_space<vmem>>, vector<1x128x128xbf16>
    %21 = vector.shape_cast %20 : vector<1x128x128xbf16> to vector<128x128xbf16>
    %cst_13 = arith.constant dense<0.000000e+00> : vector<8x128xf32>
    %22 = tpu.matmul %19, %21, %cst_13 {dimension_numbers = #tpu.dot_dimension_numbers<[1], [0], [0], [1], [0, 0, 1, 1], [], []>} : vector<8x128xbf16>, vector<128x128xbf16>, vector<8x128xf32> -> vector<8x128xf32>
    %23 = vector.extract_strided_slice %0 {offsets = [2, 0], sizes = [1, 128], strides = [1, 1]} : vector<4x128xf32> to vector<1x128xf32>
    %24 = vector.broadcast %23 : vector<1x128xf32> to vector<8x128xf32>
    %25 = arith.addf %22, %24 : vector<8x128xf32>
    %cst_14 = arith.constant 0.000000e+00 : f32
    %26 = vector.broadcast %cst_14 : f32 to vector<8x128xf32>
    %27 = arith.maximumf %25, %26 : vector<8x128xf32>
    %28 = arith.truncf %27 : vector<8x128xf32> to vector<8x128xbf16>
    %c2 = arith.constant 2 : index
    %c0_15 = arith.constant 0 : index
    %c0_16 = arith.constant 0 : index
    %29 = vector.load %arg3[%c2, %c0_15, %c0_16] : memref<3x128x128xbf16, #tpu.memory_space<vmem>>, vector<1x128x128xbf16>
    %30 = vector.shape_cast %29 : vector<1x128x128xbf16> to vector<128x128xbf16>
    %cst_17 = arith.constant dense<0.000000e+00> : vector<8x128xf32>
    %31 = tpu.matmul %28, %30, %cst_17 {dimension_numbers = #tpu.dot_dimension_numbers<[1], [0], [0], [1], [0, 0, 1, 1], [], []>} : vector<8x128xbf16>, vector<128x128xbf16>, vector<8x128xf32> -> vector<8x128xf32>
    %32 = vector.extract_strided_slice %0 {offsets = [3, 0], sizes = [1, 128], strides = [1, 1]} : vector<4x128xf32> to vector<1x128xf32>
    %33 = vector.broadcast %32 : vector<1x128xf32> to vector<8x128xf32>
    %34 = arith.addf %31, %33 : vector<8x128xf32>
    %cst_18 = arith.constant 0.000000e+00 : f32
    %35 = vector.broadcast %cst_18 : f32 to vector<8x128xf32>
    %36 = arith.maximumf %34, %35 : vector<8x128xf32>
    %37 = arith.truncf %36 : vector<8x128xf32> to vector<8x128xbf16>
    %c0_19 = arith.constant 0 : index
    %c0_20 = arith.constant 0 : index
    %38 = vector.load %arg5[%c0_19, %c0_20] : memref<128x24xbf16, #tpu.memory_space<vmem>>, vector<128x24xbf16>
    %cst_21 = arith.constant dense<0.000000e+00> : vector<8x24xf32>
    %39 = tpu.matmul %37, %38, %cst_21 {dimension_numbers = #tpu.dot_dimension_numbers<[1], [0], [0], [1], [0, 0, 1, 1], [], []>} : vector<8x128xbf16>, vector<128x24xbf16>, vector<8x24xf32> -> vector<8x24xf32>
    %40 = vector.extract_strided_slice %39 {offsets = [0, 0], sizes = [8, 16], strides = [1, 1]} : vector<8x24xf32> to vector<8x16xf32>
    %c0_22 = arith.constant 0 : index
    %c0_23 = arith.constant 0 : index
    %41 = vector.load %arg6[%c0_22, %c0_23] : memref<8x16xf32, #tpu.memory_space<vmem>>, vector<8x16xf32>
    tpu.vector_store %arg6[%c0_22, %c0_23], %40 {strides = array<i32>} : memref<8x16xf32, #tpu.memory_space<vmem>>, vector<8x16xf32>,
    %42 = vector.extract_strided_slice %39 {offsets = [0, 16], sizes = [8, 8], strides = [1, 1]} : vector<8x24xf32> to vector<8x8xf32>
    %c0_24 = arith.constant 0 : index
    %c0_25 = arith.constant 0 : index
    %43 = vector.load %arg7[%c0_24, %c0_25] : memref<8x8xf32, #tpu.memory_space<vmem>>, vector<8x8xf32>
    tpu.vector_store %arg7[%c0_24, %c0_25], %42 {strides = array<i32>} : memref<8x8xf32, #tpu.memory_space<vmem>>, vector<8x8xf32>,
    return
  }
  func.func @transform_0(%arg0: i32) -> (i32, i32) {
    %c0_i32 = arith.constant 0 : i32
    %c0_i32_0 = arith.constant 0 : i32
    return %arg0, %c0_i32 : i32, i32
  }
  func.func @transform_1(%arg0: i32) -> (i32, i32) {
    %c0_i32 = arith.constant 0 : i32
    %c0_i32_0 = arith.constant 0 : i32
    %c0_i32_1 = arith.constant 0 : i32
    return %c0_i32, %c0_i32_0 : i32, i32
  }
  func.func @transform_2(%arg0: i32) -> (i32, i32, i32) {
    %c0_i32 = arith.constant 0 : i32
    %c0_i32_0 = arith.constant 0 : i32
    %c0_i32_1 = arith.constant 0 : i32
    %c0_i32_2 = arith.constant 0 : i32
    return %c0_i32, %c0_i32_0, %c0_i32_1 : i32, i32, i32
  }
  func.func @transform_3(%arg0: i32) -> (i32, i32) {
    %c0_i32 = arith.constant 0 : i32
    %c0_i32_0 = arith.constant 0 : i32
    %c0_i32_1 = arith.constant 0 : i32
    return %c0_i32, %c0_i32_0 : i32, i32
  }
  func.func @transform_4(%arg0: i32) -> (i32, i32) {
    %c0_i32 = arith.constant 0 : i32
    %c0_i32_0 = arith.constant 0 : i32
    %c0_i32_1 = arith.constant 0 : i32
    return %c0_i32, %c0_i32_0 : i32, i32
  }
  func.func @transform_5(%arg0: i32) -> (i32, i32) {
    %c0_i32 = arith.constant 0 : i32
    %c0_i32_0 = arith.constant 0 : i32
    return %arg0, %c0_i32 : i32, i32
  }
  func.func @transform_6(%arg0: i32) -> (i32, i32) {
    %c0_i32 = arith.constant 0 : i32
    %c0_i32_0 = arith.constant 0 : i32
    return %arg0, %c0_i32 : i32, i32
  }
}

</mosaic_0001>

<llo_original>
// kernel: tpu_custom_call.1
$region0: #{tpu_custom_call.1}
  #allocation0 [shape = 'u32[]', space=smem, size = 0x4, offset = 0x4, fixed_abs, tag = 'smem constant byte address 0x4 - core index']
  #allocation1 [shape = 'u32[144,128]{1,0:T(1,128)}', space=vmem, size = 0x12000, scoped, tag = 'internal scratch']
  %s0 = inlined_call_operand.vmem [shape: f32[8,16], index: 0, kind: input, shape index: {}]
  %s1 = inlined_call_operand.vmem [shape: bf16[16,128], index: 1, kind: input, shape index: {}]
  %s2 = inlined_call_operand.hbm [shape: bf16[3,128,128], index: 2, kind: input, shape index: {}]
  %s3 = inlined_call_operand.vmem [shape: f32[4,128], index: 3, kind: input, shape index: {}]
  %s4 = inlined_call_operand.vmem [shape: bf16[128,24], index: 4, kind: input, shape index: {}]
  %s5 = inlined_call_operand.hbm [shape: f32[8,16], index: 5, kind: output, shape index: {0}]
  %s6 = inlined_call_operand.hbm [shape: f32[8,8], index: 6, kind: output, shape index: {1}]
  %7 = xla_tuple %s5, %s6
  %s8 = sld [smem:[#allocation0]]
  $region42: #{tpu_custom_call.1} parent=0
    _
  %s10 = ssub.s32 1, %s8
  %s11 = scalar_select 0, %s10, %s8
  $region1: #{tpu_custom_call.1} parent=0
    #allocation2 [shape = 'u8[98304]{0}', space=vmem, size = 0x18000, scoped, tag = 'input window, operand 2, single buffered']
    #allocation3 [shape = 's32[1]{0}', space=sflag, size = 0x4, scoped, tag = 'scoped memory for tpu_custom_call.1']
    #allocation4 [shape = 's32[1]{0}', space=sflag, size = 0x4, scoped, tag = 'scoped memory for tpu_custom_call.1']
    #allocation5 [shape = 'u8[4096]{0}', space=vmem, size = 0x1000, scoped, tag = 'output window, operand 0, single buffered']
    #allocation6 [shape = 'u8[4096]{0}', space=vmem, size = 0x1000, scoped, tag = 'output window, operand 1, single buffered']
    #allocation7 [shape = 's32[1]{0}', space=sflag, size = 0x4, scoped, tag = 'scoped memory for tpu_custom_call.1']
    %12 = vsyncpa [#allocation3], 0
    %13 = vsyncpa [#allocation4], 0
    %14 = vsyncpa [#allocation7], 0
    // Predicated region
    $region2: #{tpu_custom_call.1} parent=1 // pred_check
      _
    $region3: #{tpu_custom_call.1} parent=1 // pred_check_branch
      %16 = sbr.rel (0) target = $region5
    $region4: #{tpu_custom_call.1} parent=1 // pred_region
      _
    $region5: #{tpu_custom_call.1} parent=1 // pred_fallthru
      _
    // Predicated region
    $region6: #{tpu_custom_call.1} parent=1 // pred_check
      _
    $region7: #{tpu_custom_call.1} parent=1 // pred_check_branch
      %18 = sbr.rel (0) target = $region9
    $region8: #{tpu_custom_call.1} parent=1 // pred_region
      _
    $region9: #{tpu_custom_call.1} parent=1 // pred_fallthru
      _
    // Predicated region
    $region10: #{tpu_custom_call.1} parent=1 // pred_check
      _
    $region11: #{tpu_custom_call.1} parent=1 // pred_check_branch
      %20 = sbr.rel (0) target = $region13
    $region12: #{tpu_custom_call.1} parent=1 // pred_region
      %s22 = ssub.s32 3072, 3072
      %23 = vsyncadd [#allocation3], %s22
      %s24 = sshll.u32 [#allocation2], 4
      %s25 = int_to_ptr.vmem [resolvable:$true] %s24
      %30 = dma.hbm_to_vmem [thread:$0]  %s2, 3072, %s25, [#allocation3], 64, 64, 4
    $region13: #{tpu_custom_call.1} parent=1 // pred_fallthru
      _
    // Predicated region
    $region14: #{tpu_custom_call.1} parent=1 // pred_check
      _
    $region15: #{tpu_custom_call.1} parent=1 // pred_check_branch
      %32 = sbr.rel (0) target = $region17
    $region16: #{tpu_custom_call.1} parent=1 // pred_region
      _
    $region17: #{tpu_custom_call.1} parent=1 // pred_fallthru
      _
    // Predicated region
    $region18: #{tpu_custom_call.1} parent=1 // pred_check
      _
    $region19: #{tpu_custom_call.1} parent=1 // pred_check_branch
      %34 = sbr.rel (0) target = $region21
    $region20: #{tpu_custom_call.1} parent=1 // pred_region
      _
    $region21: #{tpu_custom_call.1} parent=1 // pred_fallthru
      _
    // Predicated region
    $region22: #{tpu_custom_call.1} parent=1 // pred_check
      _
    $region23: #{tpu_custom_call.1} parent=1 // pred_check_branch
      %36 = sbr.rel (0) target = $region25
    $region24: #{tpu_custom_call.1} parent=1 // pred_region
      %37 = dma.done [#allocation3], 3072
    $region25: #{tpu_custom_call.1} parent=1 // pred_fallthru
      _
    %v39 = vld [vmem:[%s3] sm:$0xf]
    %v40 = vld [vmem:[%s0] sm:$0xff]
    %v41 = vpack.c.bf16 %v40, %v40
    %v42 = vld [vmem:[%s1] sm:$0xf]
    %v43 = vld [vmem:[%s1 + $0x4] sm:$0xf]
    %v44 = vlaneseq
    %v45 = vshrl.u32 %v44, 7
    %v46 = vsub.s32 0, %v45
    %v47 = vrot.slane %v39, %v46
    %v50 = vunpack.c.l.b16 %v42
    %v51 = vunpack.c.l.b16 %v43
    %v52 = vpack.c.b16 %v51, %v50
    %vm54 = vcmask 130048
    %v56 = vsel %vm54, %v41, 0
    %58 = vmatprep.subr.bf16.mxu0 0
    %59 = vmatpush1.bf16.msra.mxu0 %v52
    %60 = vmatprep.subr.bf16.mxu0 0
    %61 = vmatpush1.bf16.msra.mxu0 0
    %62 = vmatprep.subr.bf16.mxu0 0
    %63 = vmatpush1.bf16.msra.mxu0 0
    %64 = vmatprep.subr.bf16.mxu0 0
    %65 = vmatpush1.bf16.msra.mxu0 0
    %66 = vmatprep.subr.bf16.mxu0 0
    %67 = vmatpush1.bf16.msra.mxu0 0
    %68 = vmatprep.subr.bf16.mxu0 0
    %69 = vmatpush1.bf16.msra.mxu0 0
    %70 = vmatprep.subr.bf16.mxu0 0
    %71 = vmatpush1.bf16.msra.mxu0 0
    %72 = vmatprep.subr.bf16.mxu0 0
    %73 = vmatpush1.bf16.msra.mxu0 0
    %74 = vmatprep.subr.bf16.mxu0 0
    %75 = vmatpush1.bf16.msra.mxu0 0
    %76 = vmatprep.subr.bf16.mxu0 0
    %77 = vmatpush1.bf16.msra.mxu0 0
    %78 = vmatprep.subr.bf16.mxu0 0
    %79 = vmatpush1.bf16.msra.mxu0 0
    %80 = vmatprep.subr.bf16.mxu0 0
    %81 = vmatpush1.bf16.msra.mxu0 0
    %82 = vmatprep.subr.bf16.mxu0 0
    %83 = vmatpush1.bf16.msra.mxu0 0
    %84 = vmatprep.subr.bf16.mxu0 0
    %85 = vmatpush1.bf16.msra.mxu0 0
    %86 = vmatprep.subr.bf16.mxu0 0
    %87 = vmatpush1.bf16.msra.mxu0 0
    %88 = vmatprep.subr.bf16.mxu0 0
    %89 = vmatpush1.bf16.msra.mxu0 0
    %90 = vmatprep.mubr.bf16.mxu0 0
    %91 = vmatmul.mubr.bf16.gmra.mrb[0].mxu0 %v56
    %v92 = vpop.f32.mrb[0].mxu0
    %v93 = vadd.f32 %v47, %v92
    %v94 = vpop.f32.mrb[0].mxu0
    %v95 = vpop.f32.mrb[0].mxu0
    %v96 = vpop.f32.mrb[0].mxu0
    %97 = vdwg.mxu0
    %v98 = vmax.f32 %v93, 0.0
    %v99 = vpack.c.bf16 %v98, %v98
    %v100 = vld [vmem:[#allocation2] sm:$0xf]
    %v101 = vld [vmem:[#allocation2 + $0x4] sm:$0xf]
    %v102 = vld [vmem:[#allocation2 + $0x8] sm:$0xf]
    %v103 = vld [vmem:[#allocation2 + $0xc] sm:$0xf]
    %v104 = vld [vmem:[#allocation2 + $0x10] sm:$0xf]
    %v105 = vld [vmem:[#allocation2 + $0x14] sm:$0xf]
    %v106 = vld [vmem:[#allocation2 + $0x18] sm:$0xf]
    %v107 = vld [vmem:[#allocation2 + $0x1c] sm:$0xf]
    %v108 = vld [vmem:[#allocation2 + $0x20] sm:$0xf]
    %v109 = vld [vmem:[#allocation2 + $0x24] sm:$0xf]
    %v110 = vld [vmem:[#allocation2 + $0x28] sm:$0xf]
    %v111 = vld [vmem:[#allocation2 + $0x2c] sm:$0xf]
    %v112 = vld [vmem:[#allocation2 + $0x30] sm:$0xf]
    %v113 = vld [vmem:[#allocation2 + $0x34] sm:$0xf]
    %v114 = vld [vmem:[#allocation2 + $0x38] sm:$0xf]
    %v115 = vld [vmem:[#allocation2 + $0x3c] sm:$0xf]
    %v116 = vlaneseq
    %v117 = vshrl.u32 %v116, 7
    %v118 = vsub.s32 1, %v117
    %v119 = vrot.slane %v39, %v118
    %v136 = vunpack.c.l.b16 %v100
    %v137 = vunpack.c.l.b16 %v101
    %v138 = vunpack.c.l.b16 %v102
    %v139 = vunpack.c.l.b16 %v103
    %v140 = vunpack.c.l.b16 %v104
    %v141 = vunpack.c.l.b16 %v105
    %v142 = vunpack.c.l.b16 %v106
    %v143 = vunpack.c.l.b16 %v107
    %v144 = vunpack.c.l.b16 %v108
    %v145 = vunpack.c.l.b16 %v109
    %v146 = vunpack.c.l.b16 %v110
    %v147 = vunpack.c.l.b16 %v111
    %v148 = vunpack.c.l.b16 %v112
    %v149 = vunpack.c.l.b16 %v113
    %v150 = vunpack.c.l.b16 %v114
    %v151 = vunpack.c.l.b16 %v115
    %v152 = vpack.c.b16 %v137, %v136
    %v153 = vpack.c.b16 %v139, %v138
    %v154 = vpack.c.b16 %v141, %v140
    %v155 = vpack.c.b16 %v143, %v142
    %v156 = vpack.c.b16 %v145, %v144
    %v157 = vpack.c.b16 %v147, %v146
    %v158 = vpack.c.b16 %v149, %v148
    %v159 = vpack.c.b16 %v151, %v150
    %168 = vmatprep.subr.bf16.mxu0 0
    %169 = vmatpush1.bf16.msra.mxu0 %v152
    %170 = vmatprep.subr.bf16.mxu0 0
    %171 = vmatpush1.bf16.msra.mxu0 %v153
    %172 = vmatprep.subr.bf16.mxu0 0
    %173 = vmatpush1.bf16.msra.mxu0 %v154
    %174 = vmatprep.subr.bf16.mxu0 0
    %175 = vmatpush1.bf16.msra.mxu0 %v155
    %176 = vmatprep.subr.bf16.mxu0 0
    %177 = vmatpush1.bf16.msra.mxu0 %v156
    %178 = vmatprep.subr.bf16.mxu0 0
    %179 = vmatpush1.bf16.msra.mxu0 %v157
    %180 = vmatprep.subr.bf16.mxu0 0
    %181 = vmatpush1.bf16.msra.mxu0 %v158
    %182 = vmatprep.subr.bf16.mxu0 0
    %183 = vmatpush1.bf16.msra.mxu0 %v159
    %184 = vmatprep.subr.bf16.mxu0 0
    %185 = vmatpush1.bf16.msra.mxu0 0
    %186 = vmatprep.subr.bf16.mxu0 0
    %187 = vmatpush1.bf16.msra.mxu0 0
    %188 = vmatprep.subr.bf16.mxu0 0
    %189 = vmatpush1.bf16.msra.mxu0 0
    %190 = vmatprep.subr.bf16.mxu0 0
    %191 = vmatpush1.bf16.msra.mxu0 0
    %192 = vmatprep.subr.bf16.mxu0 0
    %193 = vmatpush1.bf16.msra.mxu0 0
    %194 = vmatprep.subr.bf16.mxu0 0
    %195 = vmatpush1.bf16.msra.mxu0 0
    %196 = vmatprep.subr.bf16.mxu0 0
    %197 = vmatpush1.bf16.msra.mxu0 0
    %198 = vmatprep.subr.bf16.mxu0 0
    %199 = vmatpush1.bf16.msra.mxu0 0
    %200 = vmatprep.mubr.bf16.mxu0 0
    %201 = vmatmul.mubr.bf16.gmra.mrb[0].mxu0 %v99
    %v202 = vpop.f32.mrb[0].mxu0
    %v203 = vadd.f32 %v119, %v202
    %v204 = vpop.f32.mrb[0].mxu0
    %v205 = vpop.f32.mrb[0].mxu0
    %v206 = vpop.f32.mrb[0].mxu0
    %207 = vdwg.mxu0
    %v208 = vmax.f32 %v203, 0.0
    %v209 = vpack.c.bf16 %v208, %v208
    %s210 = scalar_lea.vmem [#allocation2], 64
    %v211 = vld [vmem:[%s210] sm:$0xf]
    %v212 = vld [vmem:[%s210 + $0x4] sm:$0xf]
    %v213 = vld [vmem:[%s210 + $0x8] sm:$0xf]
    %v214 = vld [vmem:[%s210 + $0xc] sm:$0xf]
    %v215 = vld [vmem:[%s210 + $0x10] sm:$0xf]
    %v216 = vld [vmem:[%s210 + $0x14] sm:$0xf]
    %v217 = vld [vmem:[%s210 + $0x18] sm:$0xf]
    %v218 = vld [vmem:[%s210 + $0x1c] sm:$0xf]
    %v219 = vld [vmem:[%s210 + $0x20] sm:$0xf]
    %v220 = vld [vmem:[%s210 + $0x24] sm:$0xf]
    %v221 = vld [vmem:[%s210 + $0x28] sm:$0xf]
    %v222 = vld [vmem:[%s210 + $0x2c] sm:$0xf]
    %v223 = vld [vmem:[%s210 + $0x30] sm:$0xf]
    %v224 = vld [vmem:[%s210 + $0x34] sm:$0xf]
    %v225 = vld [vmem:[%s210 + $0x38] sm:$0xf]
    %v226 = vld [vmem:[%s210 + $0x3c] sm:$0xf]
    %v227 = vlaneseq
    %v228 = vshrl.u32 %v227, 7
    %v229 = vsub.s32 2, %v228
    %v230 = vrot.slane %v39, %v229
    %v247 = vunpack.c.l.b16 %v211
    %v248 = vunpack.c.l.b16 %v212
    %v249 = vunpack.c.l.b16 %v213
    %v250 = vunpack.c.l.b16 %v214
    %v251 = vunpack.c.l.b16 %v215
    %v252 = vunpack.c.l.b16 %v216
    %v253 = vunpack.c.l.b16 %v217
    %v254 = vunpack.c.l.b16 %v218
    %v255 = vunpack.c.l.b16 %v219
    %v256 = vunpack.c.l.b16 %v220
    %v257 = vunpack.c.l.b16 %v221
    %v258 = vunpack.c.l.b16 %v222
    %v259 = vunpack.c.l.b16 %v223
    %v260 = vunpack.c.l.b16 %v224
    %v261 = vunpack.c.l.b16 %v225
    %v262 = vunpack.c.l.b16 %v226
    %v263 = vpack.c.b16 %v248, %v247
    %v264 = vpack.c.b16 %v250, %v249
    %v265 = vpack.c.b16 %v252, %v251
    %v266 = vpack.c.b16 %v254, %v253
    %v267 = vpack.c.b16 %v256, %v255
    %v268 = vpack.c.b16 %v258, %v257
    %v269 = vpack.c.b16 %v260, %v259
    %v270 = vpack.c.b16 %v262, %v261
    %279 = vmatprep.subr.bf16.mxu0 0
    %280 = vmatpush1.bf16.msra.mxu0 %v263
    %281 = vmatprep.subr.bf16.mxu0 0
    %282 = vmatpush1.bf16.msra.mxu0 %v264
    %283 = vmatprep.subr.bf16.mxu0 0
    %284 = vmatpush1.bf16.msra.mxu0 %v265
    %285 = vmatprep.subr.bf16.mxu0 0
    %286 = vmatpush1.bf16.msra.mxu0 %v266
    %287 = vmatprep.subr.bf16.mxu0 0
    %288 = vmatpush1.bf16.msra.mxu0 %v267
    %289 = vmatprep.subr.bf16.mxu0 0
    %290 = vmatpush1.bf16.msra.mxu0 %v268
    %291 = vmatprep.subr.bf16.mxu0 0
    %292 = vmatpush1.bf16.msra.mxu0 %v269
    %293 = vmatprep.subr.bf16.mxu0 0
    %294 = vmatpush1.bf16.msra.mxu0 %v270
    %295 = vmatprep.subr.bf16.mxu0 0
    %296 = vmatpush1.bf16.msra.mxu0 0
    %297 = vmatprep.subr.bf16.mxu0 0
    %298 = vmatpush1.bf16.msra.mxu0 0
    %299 = vmatprep.subr.bf16.mxu0 0
    %300 = vmatpush1.bf16.msra.mxu0 0
    %301 = vmatprep.subr.bf16.mxu0 0
    %302 = vmatpush1.bf16.msra.mxu0 0
    %303 = vmatprep.subr.bf16.mxu0 0
    %304 = vmatpush1.bf16.msra.mxu0 0
    %305 = vmatprep.subr.bf16.mxu0 0
    %306 = vmatpush1.bf16.msra.mxu0 0
    %307 = vmatprep.subr.bf16.mxu0 0
    %308 = vmatpush1.bf16.msra.mxu0 0
    %309 = vmatprep.subr.bf16.mxu0 0
    %310 = vmatpush1.bf16.msra.mxu0 0
    %311 = vmatprep.mubr.bf16.mxu0 0
    %312 = vmatmul.mubr.bf16.gmra.mrb[0].mxu0 %v209
    %v313 = vpop.f32.mrb[0].mxu0
    %v314 = vadd.f32 %v230, %v313
    %v315 = vpop.f32.mrb[0].mxu0
    %v316 = vpop.f32.mrb[0].mxu0
    %v317 = vpop.f32.mrb[0].mxu0
    %318 = vdwg.mxu0
    %v319 = vmax.f32 %v314, 0.0
    %v320 = vpack.c.bf16 %v319, %v319
    %s321 = scalar_lea.vmem [#allocation2], 128
    %v322 = vld [vmem:[%s321] sm:$0xf]
    %v323 = vld [vmem:[%s321 + $0x4] sm:$0xf]
    %v324 = vld [vmem:[%s321 + $0x8] sm:$0xf]
    %v325 = vld [vmem:[%s321 + $0xc] sm:$0xf]
    %v326 = vld [vmem:[%s321 + $0x10] sm:$0xf]
    %v327 = vld [vmem:[%s321 + $0x14] sm:$0xf]
    %v328 = vld [vmem:[%s321 + $0x18] sm:$0xf]
    %v329 = vld [vmem:[%s321 + $0x1c] sm:$0xf]
    %v330 = vld [vmem:[%s321 + $0x20] sm:$0xf]
    %v331 = vld [vmem:[%s321 + $0x24] sm:$0xf]
    %v332 = vld [vmem:[%s321 + $0x28] sm:$0xf]
    %v333 = vld [vmem:[%s321 + $0x2c] sm:$0xf]
    %v334 = vld [vmem:[%s321 + $0x30] sm:$0xf]
    %v335 = vld [vmem:[%s321 + $0x34] sm:$0xf]
    %v336 = vld [vmem:[%s321 + $0x38] sm:$0xf]
    %v337 = vld [vmem:[%s321 + $0x3c] sm:$0xf]
    %v338 = vlaneseq
    %v339 = vshrl.u32 %v338, 7
    %v340 = vsub.s32 3, %v339
    %v341 = vrot.slane %v39, %v340
    %v358 = vunpack.c.l.b16 %v322
    %v359 = vunpack.c.l.b16 %v323
    %v360 = vunpack.c.l.b16 %v324
    %v361 = vunpack.c.l.b16 %v325
    %v362 = vunpack.c.l.b16 %v326
    %v363 = vunpack.c.l.b16 %v327
    %v364 = vunpack.c.l.b16 %v328
    %v365 = vunpack.c.l.b16 %v329
    %v366 = vunpack.c.l.b16 %v330
    %v367 = vunpack.c.l.b16 %v331
    %v368 = vunpack.c.l.b16 %v332
    %v369 = vunpack.c.l.b16 %v333
    %v370 = vunpack.c.l.b16 %v334
    %v371 = vunpack.c.l.b16 %v335
    %v372 = vunpack.c.l.b16 %v336
    %v373 = vunpack.c.l.b16 %v337
    %v374 = vpack.c.b16 %v359, %v358
    %v375 = vpack.c.b16 %v361, %v360
    %v376 = vpack.c.b16 %v363, %v362
    %v377 = vpack.c.b16 %v365, %v364
    %v378 = vpack.c.b16 %v367, %v366
    %v379 = vpack.c.b16 %v369, %v368
    %v380 = vpack.c.b16 %v371, %v370
    %v381 = vpack.c.b16 %v373, %v372
    %390 = vmatprep.subr.bf16.mxu0 0
    %391 = vmatpush1.bf16.msra.mxu0 %v374
    %392 = vmatprep.subr.bf16.mxu0 0
    %393 = vmatpush1.bf16.msra.mxu0 %v375
    %394 = vmatprep.subr.bf16.mxu0 0
    %395 = vmatpush1.bf16.msra.mxu0 %v376
    %396 = vmatprep.subr.bf16.mxu0 0
    %397 = vmatpush1.bf16.msra.mxu0 %v377
    %398 = vmatprep.subr.bf16.mxu0 0
    %399 = vmatpush1.bf16.msra.mxu0 %v378
    %400 = vmatprep.subr.bf16.mxu0 0
    %401 = vmatpush1.bf16.msra.mxu0 %v379
    %402 = vmatprep.subr.bf16.mxu0 0
    %403 = vmatpush1.bf16.msra.mxu0 %v380
    %404 = vmatprep.subr.bf16.mxu0 0
    %405 = vmatpush1.bf16.msra.mxu0 %v381
    %406 = vmatprep.subr.bf16.mxu0 0
    %407 = vmatpush1.bf16.msra.mxu0 0
    %408 = vmatprep.subr.bf16.mxu0 0
    %409 = vmatpush1.bf16.msra.mxu0 0
    %410 = vmatprep.subr.bf16.mxu0 0
    %411 = vmatpush1.bf16.msra.mxu0 0
    %412 = vmatprep.subr.bf16.mxu0 0
    %413 = vmatpush1.bf16.msra.mxu0 0
    %414 = vmatprep.subr.bf16.mxu0 0
    %415 = vmatpush1.bf16.msra.mxu0 0
    %416 = vmatprep.subr.bf16.mxu0 0
    %417 = vmatpush1.bf16.msra.mxu0 0
    %418 = vmatprep.subr.bf16.mxu0 0
    %419 = vmatpush1.bf16.msra.mxu0 0
    %420 = vmatprep.subr.bf16.mxu0 0
    %421 = vmatpush1.bf16.msra.mxu0 0
    %422 = vmatprep.mubr.bf16.mxu0 0
    %423 = vmatmul.mubr.bf16.gmra.mrb[0].mxu0 %v320
    %v424 = vpop.f32.mrb[0].mxu0
    %v425 = vadd.f32 %v341, %v424
    %v426 = vpop.f32.mrb[0].mxu0
    %v427 = vpop.f32.mrb[0].mxu0
    %v428 = vpop.f32.mrb[0].mxu0
    %429 = vdwg.mxu0
    %v430 = vmax.f32 %v425, 0.0
    %v431 = vpack.c.bf16 %v430, %v430
    %v432 = vld [vmem:[%s4] sm:$0xf]
    %v433 = vld [vmem:[%s4 + $0x4] sm:$0xf]
    %v434 = vld [vmem:[%s4 + $0x8] sm:$0xf]
    %v435 = vld [vmem:[%s4 + $0xc] sm:$0xf]
    %v436 = vld [vmem:[%s4 + $0x10] sm:$0xf]
    %v437 = vld [vmem:[%s4 + $0x14] sm:$0xf]
    %v438 = vld [vmem:[%s4 + $0x18] sm:$0xf]
    %v439 = vld [vmem:[%s4 + $0x1c] sm:$0xf]
    %v440 = vld [vmem:[%s4 + $0x20] sm:$0xf]
    %v441 = vld [vmem:[%s4 + $0x24] sm:$0xf]
    %v442 = vld [vmem:[%s4 + $0x28] sm:$0xf]
    %v443 = vld [vmem:[%s4 + $0x2c] sm:$0xf]
    %v444 = vld [vmem:[%s4 + $0x30] sm:$0xf]
    %v445 = vld [vmem:[%s4 + $0x34] sm:$0xf]
    %v446 = vld [vmem:[%s4 + $0x38] sm:$0xf]
    %v447 = vld [vmem:[%s4 + $0x3c] sm:$0xf]
    %v464 = vunpack.c.l.b16 %v432
    %v465 = vunpack.c.l.b16 %v433
    %v466 = vunpack.c.l.b16 %v434
    %v467 = vunpack.c.l.b16 %v435
    %v468 = vunpack.c.l.b16 %v436
    %v469 = vunpack.c.l.b16 %v437
    %v470 = vunpack.c.l.b16 %v438
    %v471 = vunpack.c.l.b16 %v439
    %v472 = vunpack.c.l.b16 %v440
    %v473 = vunpack.c.l.b16 %v441
    %v474 = vunpack.c.l.b16 %v442
    %v475 = vunpack.c.l.b16 %v443
    %v476 = vunpack.c.l.b16 %v444
    %v477 = vunpack.c.l.b16 %v445
    %v478 = vunpack.c.l.b16 %v446
    %v479 = vunpack.c.l.b16 %v447
    %v480 = vpack.c.b16 %v465, %v464
    %v481 = vpack.c.b16 %v467, %v466
    %v482 = vpack.c.b16 %v469, %v468
    %v483 = vpack.c.b16 %v471, %v470
    %v484 = vpack.c.b16 %v473, %v472
    %v485 = vpack.c.b16 %v475, %v474
    %v486 = vpack.c.b16 %v477, %v476
    %v487 = vpack.c.b16 %v479, %v478
    %496 = vmatprep.subr.bf16.mxu0 0
    %497 = vmatpush1.bf16.msra.mxu0 %v480
    %498 = vmatprep.subr.bf16.mxu0 0
    %499 = vmatpush1.bf16.msra.mxu0 %v481
    %500 = vmatprep.subr.bf16.mxu0 0
    %501 = vmatpush1.bf16.msra.mxu0 %v482
    %502 = vmatprep.subr.bf16.mxu0 0
    %503 = vmatpush1.bf16.msra.mxu0 %v483
    %504 = vmatprep.subr.bf16.mxu0 0
    %505 = vmatpush1.bf16.msra.mxu0 %v484
    %506 = vmatprep.subr.bf16.mxu0 0
    %507 = vmatpush1.bf16.msra.mxu0 %v485
    %508 = vmatprep.subr.bf16.mxu0 0
    %509 = vmatpush1.bf16.msra.mxu0 %v486
    %510 = vmatprep.subr.bf16.mxu0 0
    %511 = vmatpush1.bf16.msra.mxu0 %v487
    %512 = vmatprep.subr.bf16.mxu0 0
    %513 = vmatpush1.bf16.msra.mxu0 0
    %514 = vmatprep.subr.bf16.mxu0 0
    %515 = vmatpush1.bf16.msra.mxu0 0
    %516 = vmatprep.subr.bf16.mxu0 0
    %517 = vmatpush1.bf16.msra.mxu0 0
    %518 = vmatprep.subr.bf16.mxu0 0
    %519 = vmatpush1.bf16.msra.mxu0 0
    %520 = vmatprep.subr.bf16.mxu0 0
    %521 = vmatpush1.bf16.msra.mxu0 0
    %522 = vmatprep.subr.bf16.mxu0 0
    %523 = vmatpush1.bf16.msra.mxu0 0
    %524 = vmatprep.subr.bf16.mxu0 0
    %525 = vmatpush1.bf16.msra.mxu0 0
    %526 = vmatprep.subr.bf16.mxu0 0
    %527 = vmatpush1.bf16.msra.mxu0 0
    %528 = vmatprep.mubr.bf16.mxu0 0
    %529 = vmatmul.mubr.bf16.gmra.mrb[0].mxu0 %v431
    %v530 = vpop.f32.mrb[0].mxu0
    %v531 = vadd.f32 0.0, %v530
    %v532 = vpop.f32.mrb[0].mxu0
    %v533 = vpop.f32.mrb[0].mxu0
    %v534 = vpop.f32.mrb[0].mxu0
    %535 = vdwg.mxu0
    %536 = vst.msk [vmem:[#allocation5] sm:$0xff] %vm54, %v531
    %538 = vrot.lane.b32.xlu0 %v531, 112
    %v539 = vpop.permute.xlu0 %538
    %vm541 = vcmask 64512
    %542 = vst.msk [vmem:[#allocation6] sm:$0xff] %vm541, %v539
    // Predicated region
    $region26: #{tpu_custom_call.1} parent=1 // pred_check
      _
    $region27: #{tpu_custom_call.1} parent=1 // pred_check_branch
      %544 = sbr.rel (0) target = $region29
    $region28: #{tpu_custom_call.1} parent=1 // pred_region
      %s546 = ssub.s32 128, 128
      %547 = vsyncadd [#allocation4], %s546
      %s549 = sshll.u32 [#allocation5], 4
      %s550 = int_to_ptr.vmem [resolvable:$true] %s549
      %552 = dma.vmem_to_hbm [thread:$0]  %s550, 128, %s5, [#allocation4]
    $region29: #{tpu_custom_call.1} parent=1 // pred_fallthru
      _
    // Predicated region
    $region30: #{tpu_custom_call.1} parent=1 // pred_check
      _
    $region31: #{tpu_custom_call.1} parent=1 // pred_check_branch
      %554 = sbr.rel (0) target = $region33
    $region32: #{tpu_custom_call.1} parent=1 // pred_region
      %s556 = ssub.s32 128, 128
      %557 = vsyncadd [#allocation7], %s556
      %s559 = sshll.u32 [#allocation6], 4
      %s560 = int_to_ptr.vmem [resolvable:$true] %s559
      %562 = dma.vmem_to_hbm [thread:$0]  %s560, 128, %s6, [#allocation7]
    $region33: #{tpu_custom_call.1} parent=1 // pred_fallthru
      _
    // Predicated region
    $region34: #{tpu_custom_call.1} parent=1 // pred_check
      _
    $region35: #{tpu_custom_call.1} parent=1 // pred_check_branch
      %564 = sbr.rel (0) target = $region37
    $region36: #{tpu_custom_call.1} parent=1 // pred_region
      %565 = dma.done [#allocation4], 128
    $region37: #{tpu_custom_call.1} parent=1 // pred_fallthru
      _
    // Predicated region
    $region38: #{tpu_custom_call.1} parent=1 // pred_check
      _
    $region39: #{tpu_custom_call.1} parent=1 // pred_check_branch
      %567 = sbr.rel (0) target = $region41
    $region40: #{tpu_custom_call.1} parent=1 // pred_region
      %568 = dma.done [#allocation7], 128
    $region41: #{tpu_custom_call.1} parent=1 // pred_fallthru
      _
    %569 = vsyncpa [#allocation3], 1
    %570 = vsyncpa [#allocation4], 1
    %571 = vsyncpa [#allocation7], 1

</llo_original>
